<compile_context>
chip_gen: v6e
topology: v6e:2x2x1
jax: 0.10.0
libtpu: 0.0.40
codegen_flags: <defaults>
</compile_context>

<pallas_src>
import jax
import jax.numpy as jnp
from jax import lax
from jax.experimental import pallas as pl
from jax.experimental.pallas import tpu as pltpu


def _round_up(x, m):
    return ((x + m - 1) // m) * m


def _mf_kernel(idx_ref, table_ref, o_ref):
    # idx_ref   : (n_tiles, 2*TB) int32, VMEM-resident (constant index_map).
    #             Row t = [user indices of tile t | item indices of tile t + NU].
    # table_ref : (K, NU+NI), VMEM-resident. Transposed + fused tables:
    #             columns [0, NU) = users_emb.T, columns [NU, NU+NI) = items_emb.T.
    # o_ref     : (1, TB) lane-dense per-row dot products.
    t = pl.program_id(0)
    TB2 = idx_ref.shape[1]
    TB = TB2 // 2
    R = table_ref.shape[1]
    dt = table_ref.dtype

    idx = idx_ref[pl.ds(t, 1), :]                            # (1, 2*TB)

    # Block-offset one-hot built directly in the table dtype (exact even in
    # bf16: a single 1.0 per column). Rows on sublanes, batch on lanes.
    oh = (lax.broadcasted_iota(jnp.int32, (R, TB2), 0) == idx).astype(dt)

    # One fused gather matmul on the MXU: (K, R) @ (R, 2*TB) -> (K, 2*TB)
    # containing [u_t | v_t], accumulated in f32.
    g = lax.dot_general(table_ref[...], oh, (((1,), (0,)), ((), ())),
                        preferred_element_type=jnp.float32)

    u_t = g[:, :TB]                                          # (K, TB)
    v_t = g[:, TB:]                                          # (K, TB)

    # VPU multiply + sublane reduce over K -> lane-dense (1, TB) output row.
    o_ref[...] = jnp.sum(u_t * v_t, axis=0, keepdims=True).astype(o_ref.dtype)


def matrix_factorization_forward(users_emb, items_emb, user, item, *, tile_b=1024):
    """Pallas equivalent of MatrixFactorization.forward.

    users_emb: (num_users, k)  f32 or bf16 (bf16 hits the native MXU path)
    items_emb: (num_items, k)  same dtype as users_emb
    user, item: (B,) integer indices
    returns: (B,) in the embedding dtype

    NOTE: out-of-range indices yield 0.0 (all-zero one-hot column) rather than
    raising like nn.Embedding.
    """
    B = user.shape[0]
    NU, K = users_emb.shape
    NI, Ki = items_emb.shape
    assert K == Ki
    dt = users_emb.dtype
    items_emb = items_emb.astype(dt)        # no-op when dtypes already match

    # Clamp the batch tile: multiple of 128 lanes, no bigger than needed.
    TB = max(128, min(_round_up(tile_b, 128), _round_up(B, 128)))
    B_padded = _round_up(B, TB)
    n_tiles = B_padded // TB

    # Fused, transposed table: big row axis on lanes, K on sublanes.
    table_t = jnp.concatenate([users_emb.T, items_emb.T], axis=1)   # (K, NU+NI)
    R = NU + NI

    # Combined index array, one row per grid step: [user idx | item idx + NU].
    u_idx = jnp.pad(user.astype(jnp.int32), (0, B_padded - B)).reshape(n_tiles, TB)
    i_idx = jnp.pad(item.astype(jnp.int32), (0, B_padded - B)).reshape(n_tiles, TB) + NU
    idx = jnp.concatenate([u_idx, i_idx], axis=1)                   # (n_tiles, 2*TB)

    # Raise the scoped-VMEM limit only when the resident footprint needs it
    # (default scoped limit is 16 MiB on v5e / 32 MiB on v6e & v7x).
    itemsize = jnp.dtype(dt).itemsize
    est_bytes = (
        2 * table_t.size * itemsize          # resident table (double-buffered)
        + 2 * idx.size * 4                   # resident index block
        + 2 * R * 2 * TB * itemsize          # one-hot temporary (+headroom)
        + 4 * K * 2 * TB * 4                 # gather result / temps
        + 2 * TB * 4                         # output tile
    )
    vmem_limit = None
    if est_bytes > 16 * 1024 * 1024:
        vmem_limit = min(_round_up(int(est_bytes * 1.5), 1 << 20), 100 * 1024 * 1024)

    out = pl.pallas_call(
        _mf_kernel,
        out_shape=jax.ShapeDtypeStruct((1, B_padded), dt),
        grid=(n_tiles,),
        in_specs=[
            pl.BlockSpec((n_tiles, 2 * TB), lambda t: (0, 0)),   # resident indices
            pl.BlockSpec((K, R), lambda t: (0, 0)),              # resident fused table
        ],
        out_specs=pl.BlockSpec((1, TB), lambda t: (0, t)),
        compiler_params=pltpu.CompilerParams(
            dimension_semantics=("parallel",),
            vmem_limit_bytes=vmem_limit),
    )(idx, table_t)

    return out[0, :B]


if __name__ == "__main__":
    # Model hyper-parameters (small, consistent with the module's __init__)
    num_users, num_items, k = 32, 48, 15
    B = 8

    key = jax.random.PRNGKey(0)
    k_u, k_i, k_uid, k_iid = jax.random.split(key, 4)

    # nn.Embedding default init: N(0, 1)
    users_emb = jax.random.normal(k_u, (num_users, k), dtype=jnp.float32)
    items_emb = jax.random.normal(k_i, (num_items, k), dtype=jnp.float32)

    user = jax.random.randint(k_uid, (B,), 0, num_users, dtype=jnp.int32)
    item = jax.random.randint(k_iid, (B,), 0, num_items, dtype=jnp.int32)

    out = matrix_factorization_forward(users_emb, items_emb, user, item)
    out = jax.block_until_ready(out)

    # Reference (plain JAX) check of forward semantics
    ref = (users_emb[user] * items_emb[item]).sum(axis=1)
    assert out.shape == (B,)
    assert jnp.allclose(out, ref, atol=1e-5, rtol=1e-5), (out, ref)

    print("KERNEL_OK")
</pallas_src>

<mosaic_0001>
module attributes {stable_mosaic.version = 11 : i64} {
  func.func @_mf_kernel(%arg0: i32, %arg1: memref<1x256xi32, #tpu.memory_space<vmem>>, %arg2: memref<15x80xf32, #tpu.memory_space<vmem>>, %arg3: memref<1x128xf32, #tpu.memory_space<vmem>>) attributes {dimension_semantics = [#tpu.dimension_semantics<parallel>], iteration_bounds = array<i64: 1>, scalar_prefetch = 0 : i64, scratch_operands = 0 : i64, tpu.core_type = #tpu.core_type<tc>, window_params = [{pipeline_mode = #tpu.pipeline_mode<synchronous>, transform_indices = @transform_0, window_bounds = array<i64: 1, 256>}, {pipeline_mode = #tpu.pipeline_mode<synchronous>, transform_indices = @transform_1, window_bounds = array<i64: 15, 80>}, {transform_indices = @transform_2, window_bounds = array<i64: 1, 128>}]} {
    %0 = arith.index_cast %arg0 : i32 to index
    %c0 = arith.constant 0 : index
    %1 = vector.load %arg1[%0, %c0] : memref<1x256xi32, #tpu.memory_space<vmem>>, vector<1x256xi32>
    %2 = tpu.iota {dimensions = array<i32: 0>} : vector<80x256xi32>
    %3 = vector.broadcast %1 : vector<1x256xi32> to vector<80x256xi32>
    %4 = arith.cmpi eq, %2, %3 : vector<80x256xi32>
    %5 = arith.extui %4 : vector<80x256xi1> to vector<80x256xi32>
    %6 = arith.sitofp %5 : vector<80x256xi32> to vector<80x256xf32>
    %c0_0 = arith.constant 0 : index
    %c0_1 = arith.constant 0 : index
    %7 = vector.load %arg2[%c0_0, %c0_1] : memref<15x80xf32, #tpu.memory_space<vmem>>, vector<15x80xf32>
    %cst = arith.constant dense<0.000000e+00> : vector<15x256xf32>
    %8 = tpu.matmul %7, %6, %cst {dimension_numbers = #tpu.dot_dimension_numbers<[1], [0], [0], [1], [0, 0, 1, 1], [], []>} : vector<15x80xf32>, vector<80x256xf32>, vector<15x256xf32> -> vector<15x256xf32>
    %9 = vector.extract_strided_slice %8 {offsets = [0, 0], sizes = [15, 128], strides = [1, 1]} : vector<15x256xf32> to vector<15x128xf32>
    %10 = vector.extract_strided_slice %8 {offsets = [0, 128], sizes = [15, 128], strides = [1, 1]} : vector<15x256xf32> to vector<15x128xf32>
    %11 = arith.mulf %9, %10 : vector<15x128xf32>
    %cst_2 = arith.constant dense<0.000000e+00> : vector<128xf32>
    %12 = vector.multi_reduction <add>, %11, %cst_2 [0] : vector<15x128xf32> to vector<128xf32>
    %13 = vector.shape_cast %12 : vector<128xf32> to vector<1x128xf32>
    %c0_3 = arith.constant 0 : index
    %c0_4 = arith.constant 0 : index
    %14 = vector.load %arg3[%c0_3, %c0_4] : memref<1x128xf32, #tpu.memory_space<vmem>>, vector<1x128xf32>
    tpu.vector_store %arg3[%c0_3, %c0_4], %13 {strides = array<i32>} : memref<1x128xf32, #tpu.memory_space<vmem>>, vector<1x128xf32>,
    return
  }
  func.func @transform_0(%arg0: i32) -> (i32, i32) {
    %c0_i32 = arith.constant 0 : i32
    %c0_i32_0 = arith.constant 0 : i32
    %c0_i32_1 = arith.constant 0 : i32
    return %c0_i32, %c0_i32_0 : i32, i32
  }
  func.func @transform_1(%arg0: i32) -> (i32, i32) {
    %c0_i32 = arith.constant 0 : i32
    %c0_i32_0 = arith.constant 0 : i32
    %c0_i32_1 = arith.constant 0 : i32
    return %c0_i32, %c0_i32_0 : i32, i32
  }
  func.func @transform_2(%arg0: i32) -> (i32, i32) {
    %c0_i32 = arith.constant 0 : i32
    %c0_i32_0 = arith.constant 0 : i32
    return %c0_i32, %arg0 : i32, i32
  }
}

</mosaic_0001>

<llo_original>
// kernel: tpu_custom_call.1
$region0: #{tpu_custom_call.1}
  #allocation0 [shape = 'u32[]', space=smem, size = 0x4, offset = 0x4, fixed_abs, tag = 'smem constant byte address 0x4 - core index']
  #allocation1 [shape = 'u32[144,128]{1,0:T(1,128)}', space=vmem, size = 0x12000, scoped, tag = 'internal scratch']
  %s0 = inlined_call_operand.hbm [shape: s32[1,256], index: 0, kind: input, shape index: {}]
  %s1 = inlined_call_operand.hbm [shape: f32[15,80], index: 1, kind: input, shape index: {}]
  %s2 = inlined_call_operand.hbm [shape: f32[1,128], index: 2, kind: output, shape index: {}]
  %s3 = sld [smem:[#allocation0]]
  $region26: #{tpu_custom_call.1} parent=0
    _
  %s5 = ssub.s32 1, %s3
  %s6 = scalar_select 0, %s5, %s3
  $region1: #{tpu_custom_call.1} parent=0
    #allocation2 [shape = 'u8[1024]{0}', space=vmem, size = 0x400, scoped, tag = 'input window, operand 0, single buffered']
    #allocation3 [shape = 's32[1]{0}', space=sflag, size = 0x4, scoped, tag = 'scoped memory for tpu_custom_call.1']
    #allocation4 [shape = 's32[1]{0}', space=sflag, size = 0x4, scoped, tag = 'scoped memory for tpu_custom_call.1']
    #allocation5 [shape = 'u8[8192]{0}', space=vmem, size = 0x2000, scoped, tag = 'input window, operand 1, single buffered']
    #allocation6 [shape = 's32[1]{0}', space=sflag, size = 0x4, scoped, tag = 'scoped memory for tpu_custom_call.1']
    #allocation7 [shape = 'u8[512]{0}', space=vmem, size = 0x400, scoped, tag = 'output window, operand 0, single buffered']
    %7 = vsyncpa [#allocation3], 0
    %8 = vsyncpa [#allocation6], 0
    %9 = vsyncpa [#allocation4], 0
    // Predicated region
    $region2: #{tpu_custom_call.1} parent=1 // pred_check
      _
    $region3: #{tpu_custom_call.1} parent=1 // pred_check_branch
      %11 = sbr.rel (0) target = $region5
    $region4: #{tpu_custom_call.1} parent=1 // pred_region
      %s13 = ssub.s32 32, 32
      %14 = vsyncadd [#allocation3], %s13
      %s16 = sshll.u32 [#allocation2], 4
      %s17 = int_to_ptr.vmem [resolvable:$true] %s16
      %19 = dma.hbm_to_vmem [thread:$0]  %s0, 32, %s17, [#allocation3]
    $region5: #{tpu_custom_call.1} parent=1 // pred_fallthru
      _
    // Predicated region
    $region6: #{tpu_custom_call.1} parent=1 // pred_check
      _
    $region7: #{tpu_custom_call.1} parent=1 // pred_check_branch
      %21 = sbr.rel (0) target = $region9
    $region8: #{tpu_custom_call.1} parent=1 // pred_region
      %s23 = ssub.s32 256, 256
      %24 = vsyncadd [#allocation6], %s23
      %s25 = sshll.u32 [#allocation5], 4
      %s26 = int_to_ptr.vmem [resolvable:$true] %s25
      %31 = dma.hbm_to_vmem [thread:$0]  %s1, 256, %s26, [#allocation6], 128, 128, 8
    $region9: #{tpu_custom_call.1} parent=1 // pred_fallthru
      _
    // Predicated region
    $region10: #{tpu_custom_call.1} parent=1 // pred_check
      _
    $region11: #{tpu_custom_call.1} parent=1 // pred_check_branch
      %33 = sbr.rel (0) target = $region13
    $region12: #{tpu_custom_call.1} parent=1 // pred_region
      %34 = dma.done [#allocation3], 32
    $region13: #{tpu_custom_call.1} parent=1 // pred_fallthru
      _
    // Predicated region
    $region14: #{tpu_custom_call.1} parent=1 // pred_check
      _
    $region15: #{tpu_custom_call.1} parent=1 // pred_check_branch
      %36 = sbr.rel (0) target = $region17
    $region16: #{tpu_custom_call.1} parent=1 // pred_region
      %37 = dma.done [#allocation6], 256
    $region17: #{tpu_custom_call.1} parent=1 // pred_fallthru
      _
    %s38 = smul.u32 0, 2
    %s39 = scalar_lea.vmem [#allocation2], %s38
    %v40 = vld [vmem:[%s39] sm:$0x3]
    %v41 = vlaneseq
    %v42 = vshrl.u32 %v41, 7
    %v43 = vadd.s32 %v42, 8
    %v44 = vadd.s32 %v42, 16
    %v45 = vadd.s32 %v42, 24
    %v46 = vadd.s32 %v42, 32
    %v47 = vadd.s32 %v42, 40
    %v48 = vadd.s32 %v42, 48
    %v49 = vadd.s32 %v42, 56
    %v50 = vadd.s32 %v42, 64
    %v51 = vadd.s32 %v42, 72
    %v52 = vlaneseq
    %v53 = vshrl.u32 %v52, 7
    %v54 = vsub.s32 0, %v53
    %v55 = vrot.slane %v40, %v54
    %v56 = vlaneseq
    %v57 = vshrl.u32 %v56, 7
    %v58 = vsub.s32 1, %v57
    %v59 = vrot.slane %v40, %v58
    %vm60 = vcmp.eq.s32.totalorder %v42, %v55
    %vm61 = vcmp.eq.s32.totalorder %v42, %v59
    %vm62 = vcmp.eq.s32.totalorder %v43, %v55
    %vm63 = vcmp.eq.s32.totalorder %v43, %v59
    %vm64 = vcmp.eq.s32.totalorder %v44, %v55
    %vm65 = vcmp.eq.s32.totalorder %v44, %v59
    %vm66 = vcmp.eq.s32.totalorder %v45, %v55
    %vm67 = vcmp.eq.s32.totalorder %v45, %v59
    %vm68 = vcmp.eq.s32.totalorder %v46, %v55
    %vm69 = vcmp.eq.s32.totalorder %v46, %v59
    %vm70 = vcmp.eq.s32.totalorder %v47, %v55
    %vm71 = vcmp.eq.s32.totalorder %v47, %v59
    %vm72 = vcmp.eq.s32.totalorder %v48, %v55
    %vm73 = vcmp.eq.s32.totalorder %v48, %v59
    %vm74 = vcmp.eq.s32.totalorder %v49, %v55
    %vm75 = vcmp.eq.s32.totalorder %v49, %v59
    %vm76 = vcmp.eq.s32.totalorder %v50, %v55
    %vm77 = vcmp.eq.s32.totalorder %v50, %v59
    %vm78 = vcmp.eq.s32.totalorder %v51, %v55
    %vm79 = vcmp.eq.s32.totalorder %v51, %v59
    %v80 = vsel %vm60, 1, 0
    %v81 = vsel %vm61, 1, 0
    %v82 = vsel %vm62, 1, 0
    %v83 = vsel %vm63, 1, 0
    %v84 = vsel %vm64, 1, 0
    %v85 = vsel %vm65, 1, 0
    %v86 = vsel %vm66, 1, 0
    %v87 = vsel %vm67, 1, 0
    %v88 = vsel %vm68, 1, 0
    %v89 = vsel %vm69, 1, 0
    %v90 = vsel %vm70, 1, 0
    %v91 = vsel %vm71, 1, 0
    %v92 = vsel %vm72, 1, 0
    %v93 = vsel %vm73, 1, 0
    %v94 = vsel %vm74, 1, 0
    %v95 = vsel %vm75, 1, 0
    %v96 = vsel %vm76, 1, 0
    %v97 = vsel %vm77, 1, 0
    %v98 = vsel %vm78, 1, 0
    %v99 = vsel %vm79, 1, 0
    %v100 = vcvt.s32.f32 %v80
    %v101 = vcvt.s32.f32 %v81
    %v102 = vcvt.s32.f32 %v82
    %v103 = vcvt.s32.f32 %v83
    %v104 = vcvt.s32.f32 %v84
    %v105 = vcvt.s32.f32 %v85
    %v106 = vcvt.s32.f32 %v86
    %v107 = vcvt.s32.f32 %v87
    %v108 = vcvt.s32.f32 %v88
    %v109 = vcvt.s32.f32 %v89
    %v110 = vcvt.s32.f32 %v90
    %v111 = vcvt.s32.f32 %v91
    %v112 = vcvt.s32.f32 %v92
    %v113 = vcvt.s32.f32 %v93
    %v114 = vcvt.s32.f32 %v94
    %v115 = vcvt.s32.f32 %v95
    %v116 = vcvt.s32.f32 %v96
    %v117 = vcvt.s32.f32 %v97
    %v118 = vcvt.s32.f32 %v98
    %v119 = vcvt.s32.f32 %v99
    %v120 = vld [vmem:[#allocation5] sm:$0xff]
    %v121 = vld [vmem:[#allocation5 + $0x8] sm:$0x7f]
    %vm122 = vcmask 654336
    %v124 = vsel %vm122, %v120, 0
    %v127 = vsel %vm122, %v121, 0
    %129 = vmatprep.subr.mxu0 0.0
    %130 = vmatpush1.msra.mxu0 0.0
    %131 = vmatprep.subr.mxu0 0.0
    %132 = vmatpush1.msra.mxu0 0.0
    %133 = vmatprep.subr.mxu0 0.0
    %134 = vmatpush1.msra.mxu0 0.0
    %135 = vmatprep.subr.mxu0 0.0
    %136 = vmatpush1.msra.mxu0 0.0
    %137 = vmatprep.subr.mxu0 0.0
    %138 = vmatpush1.msra.mxu0 0.0
    %139 = vmatprep.subr.mxu0 0.0
    %140 = vmatpush1.msra.mxu0 0.0
    %141 = vmatprep.subr.mxu0 %v119
    %142 = vmatpush1.msra.mxu0 %v118
    %143 = vmatprep.subr.mxu0 %v117
    %144 = vmatpush1.msra.mxu0 %v116
    %145 = vmatprep.subr.mxu0 %v115
    %146 = vmatpush1.msra.mxu0 %v114
    %147 = vmatprep.subr.mxu0 %v113
    %148 = vmatpush1.msra.mxu0 %v112
    %149 = vmatprep.subr.mxu0 %v111
    %150 = vmatpush1.msra.mxu0 %v110
    %151 = vmatprep.subr.mxu0 %v109
    %152 = vmatpush1.msra.mxu0 %v108
    %153 = vmatprep.subr.mxu0 %v107
    %154 = vmatpush1.msra.mxu0 %v106
    %155 = vmatprep.subr.mxu0 %v105
    %156 = vmatpush1.msra.mxu0 %v104
    %157 = vmatprep.subr.mxu0 %v103
    %158 = vmatpush1.msra.mxu0 %v102
    %159 = vmatprep.subr.mxu0 %v101
    %160 = vmatpush1.msra.mxu0 %v100
    %161 = vmatprep.subr.mxu0 0.0
    %162 = vmatpush2.msra.mxu0 0.0
    %163 = vmatprep.subr.mxu0 0.0
    %164 = vmatpush2.msra.mxu0 0.0
    %165 = vmatprep.subr.mxu0 0.0
    %166 = vmatpush2.msra.mxu0 0.0
    %167 = vmatprep.subr.mxu0 0.0
    %168 = vmatpush2.msra.mxu0 0.0
    %169 = vmatprep.subr.mxu0 0.0
    %170 = vmatpush2.msra.mxu0 0.0
    %171 = vmatprep.subr.mxu0 0.0
    %172 = vmatpush2.msra.mxu0 0.0
    %173 = vmatprep.subr.mxu0 0.0
    %174 = vmatpush2.msra.mxu0 0.0
    %175 = vmatprep.subr.mxu0 0.0
    %176 = vmatpush2.msra.mxu0 0.0
    %177 = vmatprep.subr.mxu0 0.0
    %178 = vmatpush2.msra.mxu0 0.0
    %179 = vmatprep.subr.mxu0 0.0
    %180 = vmatpush2.msra.mxu0 0.0
    %181 = vmatprep.subr.mxu0 0.0
    %182 = vmatpush2.msra.mxu0 0.0
    %183 = vmatprep.subr.mxu0 0.0
    %184 = vmatpush2.msra.mxu0 0.0
    %185 = vmatprep.subr.mxu0 0.0
    %186 = vmatpush2.msra.mxu0 0.0
    %187 = vmatprep.subr.mxu0 0.0
    %188 = vmatpush2.msra.mxu0 0.0
    %189 = vmatprep.subr.mxu0 0.0
    %190 = vmatpush2.msra.mxu0 0.0
    %191 = vmatprep.subr.mxu0 0.0
    %192 = vmatpush2.msra.mxu0 0.0
    %193 = vmatprep.mubr.f32.mxu0 0.0
    %194 = vmatmul.mubr.f32.gmra.mxu0 %v124
    %v195 = vpop.f32.mrf.mxu0
    %v196 = vadd.f32 0.0, %v195
    %v197 = vpop.f32.mrf.mxu0
    %v198 = vadd.f32 0.0, %v197
    %199 = vmatprep.mubr.f32.mxu0 0.0
    %200 = vmatmul.mubr.f32.gmra.mxu0 %v127
    %v201 = vpop.f32.mrf.mxu0
    %v202 = vadd.f32 0.0, %v201
    %v203 = vpop.f32.mrf.mxu0
    %v204 = vadd.f32 0.0, %v203
    %205 = vdwg.mxu0
    %v206 = vmul.f32 %v196, %v198
    %v207 = vmul.f32 %v202, %v204
    %vm208 = vcmask 1046528
    %v209 = vsel %vm208, %v207, 0.0
    %v210 = vadd.f32 %v206, %v209
    %v211 = vrot.slane %v210, 4
    %v212 = vadd.f32 %v210, %v211
    %v213 = vrot.slane %v212, 2
    %v214 = vadd.f32 %v212, %v213
    %v215 = vrot.slane %v214, 1
    %v216 = vadd.f32 %v214, %v215
    %217 = vst [vmem:[#allocation7] sm:$0x1] %v216
    // Predicated region
    $region18: #{tpu_custom_call.1} parent=1 // pred_check
      _
    $region19: #{tpu_custom_call.1} parent=1 // pred_check_branch
      %219 = sbr.rel (0) target = $region21
    $region20: #{tpu_custom_call.1} parent=1 // pred_region
      %s221 = ssub.s32 16, 16
      %222 = vsyncadd [#allocation4], %s221
      %s224 = sshll.u32 [#allocation7], 4
      %s225 = int_to_ptr.vmem [resolvable:$true] %s224
      %227 = dma.vmem_to_hbm [thread:$0]  %s225, 16, %s2, [#allocation4]
    $region21: #{tpu_custom_call.1} parent=1 // pred_fallthru
      _
    // Predicated region
    $region22: #{tpu_custom_call.1} parent=1 // pred_check
      _
    $region23: #{tpu_custom_call.1} parent=1 // pred_check_branch
      %229 = sbr.rel (0) target = $region25
    $region24: #{tpu_custom_call.1} parent=1 // pred_region
      %230 = dma.done [#allocation4], 16
    $region25: #{tpu_custom_call.1} parent=1 // pred_fallthru
      _
    %231 = vsyncpa [#allocation3], 1
    %232 = vsyncpa [#allocation6], 1
    %233 = vsyncpa [#allocation4], 1

</llo_original>
